<compile_context>
chip_gen: v5e
topology: v5e:2x2
jax: 0.10.0
libtpu: 0.0.40
codegen_flags: <defaults>
</compile_context>

<pallas_src>
import math

import jax
import jax.numpy as jnp
import numpy as np
from jax.experimental import pallas as pl
from jax.experimental.pallas import tpu as pltpu

_LANE = 128                          # TPU lane width
_X_BLOCK_TARGET_BYTES = 2 << 20      # ~2 MiB of activations per grid step
_VMEM_BUDGET_BYTES = 12 << 20        # double-buffered footprint budget (safe on v5e/v6e/v7x)
_MAX_BATCH_TILE = 16                 # cap on the in-kernel (unrolled) batch loop


def _ceil_div(a, b):
    return -(-a // b)


def _round_up(a, m):
    return _ceil_div(a, m) * m


def _pick_tiles(B, K, W, N, x_itemsize):
    """Choose (batch_tile TB, width_tile TW) for the (TB, K, TW) activation block."""
    out_itemsize = 4  # f32 output

    def db_footprint(tb, tw):
        # double-buffered x + out blocks plus the resident weight/bias
        return (2 * tb * K * tw * x_itemsize
                + 2 * tb * tw * N * out_itemsize
                + N * K * x_itemsize + N * out_itemsize)

    row_bytes = K * W * x_itemsize  # one full-W batch row of x
    if row_bytes >= _X_BLOCK_TARGET_BYTES and W >= 2 * _LANE:
        # Large-W regime: lane-aligned, byte-targeted W tiles; one batch row per step.
        tw = max(_LANE, (_X_BLOCK_TARGET_BYTES // (K * x_itemsize)) // _LANE * _LANE)
        while tw > _LANE and db_footprint(1, tw) > _VMEM_BUDGET_BYTES:
            tw = max(_LANE, (tw // 2) // _LANE * _LANE)
        # Balance W tiles so the trailing tile is not a tiny ragged remainder.
        n_w = _ceil_div(W, tw)
        tw = _round_up(_ceil_div(W, n_w), _LANE)
        # v7x megacore: keep at least two grid steps so both TensorCores get work.
        if B * _ceil_div(W, tw) < 2:
            tw = _round_up(_ceil_div(W, 2), _LANE)
        return 1, tw

    # Small/moderate-W regime: whole W per step; pack several batch rows per block.
    tb = max(1, min(B, _X_BLOCK_TARGET_BYTES // max(1, row_bytes)))
    tb = min(tb, _MAX_BATCH_TILE)
    while tb > 1 and db_footprint(tb, W) > _VMEM_BUDGET_BYTES:
        tb = _ceil_div(tb, 2)
    if B > 1 and _ceil_div(B, tb) < 2:
        tb = _ceil_div(B, 2)  # keep >= 2 grid steps for megacore sharding
    return tb, W


def _detector_kernel(w_ref, b_ref, x_ref, o_ref):
    # w_ref: (N, K) bf16 weights | b_ref: (N, 1) f32 bias
    # x_ref: (TB, K, TW) bf16 activations (lane axis = W)
    # o_ref: (TB, TW, N) f32 probabilities (final layout, no wrapper transpose)
    w = w_ref[...]
    bias = b_ref[...]
    for b in range(x_ref.shape[0]):  # TB is a small static constant -> unrolled
        # (N, TW) logits, lane-dense along TW; f32 accumulation on the MXU.
        logits = jnp.dot(w, x_ref[b], preferred_element_type=jnp.float32) + bias
        # Exact, numerically-stable sigmoid (no exp overflow, no approx reciprocal).
        e = jnp.exp(-jnp.abs(logits))            # EUP
        s = e / (1.0 + e)                        # sigmoid(-|logits|)
        probs = jnp.where(logits >= 0.0, 1.0 - s, s)
        # (N, TW) -> (TW, N) on the XLU so the kernel stores the (B, W, N) layout
        # directly; this replaces a full extra HBM pass in the wrapper.
        o_ref[b] = jnp.transpose(probs).astype(o_ref.dtype)


def single_detector_forward(x_nchw, weight, bias, *, compute_dtype=jnp.bfloat16):
    """
    x_nchw: (B, feature_dim, 1, W) float32 (NCHW, same as the PyTorch module)
    weight: (nb_class, feature_dim) float32 (1x1 conv weight with trailing dims squeezed)
    bias:   (nb_class,)             float32
    returns: (B, W, nb_class) float32 sigmoid probabilities
    """
    B, K, H, W = x_nchw.shape
    assert H == 1, "SingleDetector expects H == 1 (squeeze(dim=2))"
    N = weight.shape[0]
    assert weight.shape == (N, K)

    x_itemsize = jnp.dtype(compute_dtype).itemsize
    # Free reshape of NCHW with H == 1; channels stay second so W is the lane axis.
    x_bkw = x_nchw.reshape(B, K, W).astype(compute_dtype)
    w_c = weight.astype(compute_dtype)
    b_col = bias.astype(jnp.float32).reshape(N, 1)

    TB, TW = _pick_tiles(B, K, W, N, x_itemsize)
    grid = (pl.cdiv(B, TB), pl.cdiv(W, TW))

    cost = pl.CostEstimate(
        flops=2 * B * W * K * N,
        transcendentals=B * W * N,
        bytes_accessed=(B * K * W * x_itemsize + N * K * x_itemsize + N * 4
                        + B * W * N * 4),
    )

    return pl.pallas_call(
        _detector_kernel,
        out_shape=jax.ShapeDtypeStruct((B, W, N), jnp.float32),
        grid_spec=pltpu.PrefetchScalarGridSpec(
            num_scalar_prefetch=0,
            grid=grid,
            in_specs=[
                # Weight & bias: constant index maps -> fetched once, resident in VMEM.
                pl.BlockSpec((N, K), lambda bi, wi: (0, 0)),
                pl.BlockSpec((N, 1), lambda bi, wi: (0, 0)),
                # Activations: (TB, K, TW) block streamed over (batch, W) grid.
                pl.BlockSpec((TB, K, TW), lambda bi, wi: (bi, 0, wi)),
            ],
            out_specs=pl.BlockSpec((TB, TW, N), lambda bi, wi: (bi, wi, 0)),
        ),
        compiler_params=pltpu.CompilerParams(
            dimension_semantics=("parallel", "parallel")),
        cost_estimate=cost,
    )(w_c, b_col, x_bkw)


def init_params(key, feature_dim, nb_class):
    # Xavier-uniform for a (nb_class, feature_dim, 1, 1) conv kernel, zero bias.
    bound = float(np.sqrt(6.0 / (feature_dim + nb_class)))
    weight = jax.random.uniform(
        key, (nb_class, feature_dim), minval=-bound, maxval=bound, dtype=jnp.float32)
    bias = jnp.zeros((nb_class,), dtype=jnp.float32)
    return weight, bias


if __name__ == "__main__":
    B, feature_dim, W, nb_class = 2, 32, 16, 8

    key = jax.random.PRNGKey(0)
    k_x, k_w = jax.random.split(key)

    x = jax.random.normal(k_x, (B, feature_dim, 1, W), dtype=jnp.float32)
    weight, bias = init_params(k_w, feature_dim, nb_class)

    fwd = jax.jit(single_detector_forward, static_argnames=("compute_dtype",))
    out = jax.block_until_ready(fwd(x, weight, bias))

    # Pure-JAX f32 reference (same math, no Pallas).
    ref = jax.nn.sigmoid(jnp.einsum("bkw,ck->bwc", x[:, :, 0, :], weight) + bias)
    assert out.shape == (B, W, nb_class)
    # Tolerance covers the bf16 activation/weight stream (accumulation is f32).
    np.testing.assert_allclose(np.asarray(out), np.asarray(ref), rtol=1e-2, atol=1e-2)

    print("KERNEL_OK")
</pallas_src>

<mosaic_0001>
module attributes {stable_mosaic.version = 11 : i64} {
  func.func @_detector_kernel(%arg0: i32, %arg1: i32, %arg2: memref<8x32xbf16, #tpu.memory_space<vmem>>, %arg3: memref<8x1xf32, #tpu.memory_space<vmem>>, %arg4: memref<1x32x16xbf16, #tpu.memory_space<vmem>>, %arg5: memref<1x16x8xf32, #tpu.memory_space<vmem>>) attributes {dimension_semantics = [#tpu.dimension_semantics<parallel>, #tpu.dimension_semantics<parallel>], iteration_bounds = array<i64: 2, 1>, scalar_prefetch = 0 : i64, scratch_operands = 0 : i64, tpu.core_type = #tpu.core_type<tc>, window_params = [{pipeline_mode = #tpu.pipeline_mode<synchronous>, transform_indices = @transform_0, window_bounds = array<i64: 8, 32>}, {pipeline_mode = #tpu.pipeline_mode<synchronous>, transform_indices = @transform_1, window_bounds = array<i64: 8, 1>}, {transform_indices = @transform_2, window_bounds = array<i64: 1, 32, 16>}, {transform_indices = @transform_3, window_bounds = array<i64: 1, 16, 8>}]} {
    %c0 = arith.constant 0 : index
    %c0_0 = arith.constant 0 : index
    %0 = vector.load %arg2[%c0, %c0_0] : memref<8x32xbf16, #tpu.memory_space<vmem>>, vector<8x32xbf16>
    %c0_1 = arith.constant 0 : index
    %c0_2 = arith.constant 0 : index
    %1 = vector.load %arg3[%c0_1, %c0_2] : memref<8x1xf32, #tpu.memory_space<vmem>>, vector<8x1xf32>
    %c0_3 = arith.constant 0 : index
    %c0_4 = arith.constant 0 : index
    %c0_5 = arith.constant 0 : index
    %2 = vector.load %arg4[%c0_3, %c0_4, %c0_5] : memref<1x32x16xbf16, #tpu.memory_space<vmem>>, vector<1x32x16xbf16>
    %3 = vector.shape_cast %2 : vector<1x32x16xbf16> to vector<32x16xbf16>
    %cst = arith.constant dense<0.000000e+00> : vector<8x16xf32>
    %4 = tpu.matmul %0, %3, %cst {dimension_numbers = #tpu.dot_dimension_numbers<[1], [0], [0], [1], [0, 0, 1, 1], [], []>} : vector<8x32xbf16>, vector<32x16xbf16>, vector<8x16xf32> -> vector<8x16xf32>
    %5 = vector.broadcast %1 : vector<8x1xf32> to vector<8x16xf32>
    %6 = arith.addf %4, %5 : vector<8x16xf32>
    %7 = math.absf %6 : vector<8x16xf32>
    %cst_6 = arith.constant 0.000000e+00 : f32
    %8 = vector.broadcast %cst_6 : f32 to vector<8x16xf32>
    %9 = arith.subf %8, %7 : vector<8x16xf32>
    %10 = math.exp %9 : vector<8x16xf32>
    %cst_7 = arith.constant 1.000000e+00 : f32
    %11 = vector.broadcast %cst_7 : f32 to vector<8x16xf32>
    %12 = arith.addf %11, %10 : vector<8x16xf32>
    %13 = arith.divf %10, %12 : vector<8x16xf32>
    %cst_8 = arith.constant 0.000000e+00 : f32
    %14 = vector.broadcast %cst_8 : f32 to vector<8x16xf32>
    %15 = arith.cmpf oge, %6, %14 : vector<8x16xf32>
    %cst_9 = arith.constant 1.000000e+00 : f32
    %16 = vector.broadcast %cst_9 : f32 to vector<8x16xf32>
    %17 = arith.subf %16, %13 : vector<8x16xf32>
    %18 = arith.select %15, %17, %13 : vector<8x16xi1>, vector<8x16xf32>
    %19 = tpu.transpose %18, [1, 0] : vector<8x16xf32> -> vector<16x8xf32>
    %c0_10 = arith.constant 0 : index
    %c0_11 = arith.constant 0 : index
    %c0_12 = arith.constant 0 : index
    %20 = vector.load %arg5[%c0_10, %c0_11, %c0_12] : memref<1x16x8xf32, #tpu.memory_space<vmem>>, vector<1x16x8xf32>
    %21 = vector.shape_cast %20 : vector<1x16x8xf32> to vector<16x8xf32>
    %22 = vector.shape_cast %19 : vector<16x8xf32> to vector<1x16x8xf32>
    tpu.vector_store %arg5[%c0_10, %c0_11, %c0_12], %22 {strides = array<i32>} : memref<1x16x8xf32, #tpu.memory_space<vmem>>, vector<1x16x8xf32>,
    return
  }
  func.func @transform_0(%arg0: i32, %arg1: i32) -> (i32, i32) {
    %c0_i32 = arith.constant 0 : i32
    %c0_i32_0 = arith.constant 0 : i32
    %c0_i32_1 = arith.constant 0 : i32
    return %c0_i32, %c0_i32_0 : i32, i32
  }
  func.func @transform_1(%arg0: i32, %arg1: i32) -> (i32, i32) {
    %c0_i32 = arith.constant 0 : i32
    %c0_i32_0 = arith.constant 0 : i32
    %c0_i32_1 = arith.constant 0 : i32
    return %c0_i32, %c0_i32_0 : i32, i32
  }
  func.func @transform_2(%arg0: i32, %arg1: i32) -> (i32, i32, i32) {
    %c0_i32 = arith.constant 0 : i32
    %c0_i32_0 = arith.constant 0 : i32
    return %arg0, %c0_i32, %arg1 : i32, i32, i32
  }
  func.func @transform_3(%arg0: i32, %arg1: i32) -> (i32, i32, i32) {
    %c0_i32 = arith.constant 0 : i32
    %c0_i32_0 = arith.constant 0 : i32
    return %arg0, %arg1, %c0_i32 : i32, i32, i32
  }
}

</mosaic_0001>

<llo_original>
// kernel: single_detector_forward.1
$region0: #{single_detector_forward.1}
  #allocation0 [shape = 'u32[]', space=smem, size = 0x4, offset = 0x4, fixed_abs, tag = 'smem constant byte address 0x4 - core index']
  #allocation1 [shape = 'u32[72,128]{1,0:T(1,128)}', space=vmem, size = 0x9000, scoped, tag = 'internal scratch']
  %s0 = inlined_call_operand.vmem [shape: bf16[8,32], index: 0, kind: input, shape index: {}]
  %s1 = inlined_call_operand.vmem [shape: f32[8,1], index: 1, kind: input, shape index: {}]
  %s2 = inlined_call_operand.vmem [shape: bf16[2,32,16], index: 2, kind: input, shape index: {}]
  %s3 = inlined_call_operand.vmem [shape: f32[2,16,8], index: 3, kind: output, shape index: {}]
  %s4 = sld [smem:[#allocation0]]
  $region45: #{single_detector_forward.1} parent=0
    _
  %s6 = ssub.s32 1, %s4
  %s7 = scalar_select 0, %s6, %s4
  loop: start=0, step=1, limit=4
  $region2: #{single_detector_forward.1} parent=0 // loop_pre_header
    _
  $region3: #{single_detector_forward.1} parent=0 // loop_header
    %s9 = sphi 0, %s13
    %p10 = scmp.ge.s32.totalorder %s9, 4
    %s16 = sphi 0, %s28
    %s17 = sphi 0, %s24
    %s18 = sphi 0, %s16
    %s19 = sphi 0, %s17
    %s20 = sphi 0, %s18
    %s21 = sphi 0, %s19
    %s29 = sphi 0, %s29
    %s31 = sphi 0, %s29
    %s32 = sphi 0, %s31
    %s46 = sphi 0, %s32
    %s50 = sphi 0, %s50
    %s52 = sphi 0, %s50
    %s53 = sphi 0, %s52
    %s67 = sphi 0, %s53
    %s75 = sphi 0, %s77
    %s78 = sphi 0, %s75
    %s79 = sphi 0, %s78
    %s95 = sphi 0, %s79
    %s103 = sphi 0, %s105
    %s106 = sphi 0, %s103
    %s107 = sphi 0, %s106
    %s123 = sphi 0, %s107
  $region4: #{single_detector_forward.1} parent=0 // loop_header_branch
    %12 = sbr.rel (%p10) target = $region8
  $region5: #{single_detector_forward.1} parent=0 // loop_body
    %s14 = ssub.s32 %s9, 1
    %s15 = ssub.s32 %s9, 2
    %s22 = sadd.s32 1, %s17
    %p23 = scmp.ge.s32.totalorder %s22, 1
    %s24 = scalar_select %p23, 0, %s22
    %s25 = sadd.s32 1, %s16
    %s26 = scalar_select %p23, %s25, %s16
    %p27 = scmp.ge.s32.totalorder %s26, 2
    %s28 = scalar_select %p27, 0, %s26
    %s30 = sadd.s32 %s29, 1
    %p33 = scmp.eq.s32.totalorder %s9, 1
    %p34 = scmp.ne.s32.totalorder %s29, %s31
    %p35 = scmp.eq.s32.totalorder %s9, 0
    %p36 = por %p34, %p35
    %p37 = scmp.ne.s32.totalorder %s29, %s31
    %p38 = scmp.eq.s32.totalorder %s14, 1
    %p39 = por %p37, %p38
    %p40 = scmp.ne.s32.totalorder %s31, %s32
    %p41 = scmp.eq.s32.totalorder %s14, 0
    %p42 = por %p40, %p41
    %p43 = scmp.ne.s32.totalorder %s31, %s32
    %p44 = scmp.eq.s32.totalorder %s15, 1
    %p45 = por %p43, %p44
    %p47 = scmp.ne.s32.totalorder %s32, %s46
    %p48 = scmp.eq.s32.totalorder %s15, 0
    %p49 = por %p47, %p48
    %s51 = sadd.s32 %s50, 1
    %p54 = scmp.eq.s32.totalorder %s9, 1
    %p55 = scmp.ne.s32.totalorder %s50, %s52
    %p56 = scmp.eq.s32.totalorder %s9, 0
    %p57 = por %p55, %p56
    %p58 = scmp.ne.s32.totalorder %s50, %s52
    %p59 = scmp.eq.s32.totalorder %s14, 1
    %p60 = por %p58, %p59
    %p61 = scmp.ne.s32.totalorder %s52, %s53
    %p62 = scmp.eq.s32.totalorder %s14, 0
    %p63 = por %p61, %p62
    %p64 = scmp.ne.s32.totalorder %s52, %s53
    %p65 = scmp.eq.s32.totalorder %s15, 1
    %p66 = por %p64, %p65
    %p68 = scmp.ne.s32.totalorder %s53, %s67
    %p69 = scmp.eq.s32.totalorder %s15, 0
    %p70 = por %p68, %p69
    %s71 = ssub.s32 %s16, %s28
    %s72 = ssub.s32 %s17, %s24
    %s73 = sor.u32 %s71, %s72
    %p74 = scmp.eq.s32.totalorder %s73, 0
    %s76 = sadd.s32 %s75, 1
    %s77 = scalar_select %p74, %s75, %s76
    %p80 = pneg %p74
    %p81 = scmp.eq.s32.totalorder %s9, 1
    %p82 = por %p80, %p81
    %p83 = scmp.ne.s32.totalorder %s75, %s78
    %p84 = scmp.eq.s32.totalorder %s9, 0
    %p85 = por %p83, %p84
    %p86 = scmp.ne.s32.totalorder %s75, %s78
    %p87 = scmp.eq.s32.totalorder %s14, 1
    %p88 = por %p86, %p87
    %p89 = scmp.ne.s32.totalorder %s78, %s79
    %p90 = scmp.eq.s32.totalorder %s14, 0
    %p91 = por %p89, %p90
    %p92 = scmp.ne.s32.totalorder %s78, %s79
    %p93 = scmp.eq.s32.totalorder %s15, 1
    %p94 = por %p92, %p93
    %p96 = scmp.ne.s32.totalorder %s79, %s95
    %p97 = scmp.eq.s32.totalorder %s15, 0
    %p98 = por %p96, %p97
    %s99 = ssub.s32 %s16, %s28
    %s100 = ssub.s32 %s17, %s24
    %s101 = sor.u32 %s99, %s100
    %p102 = scmp.eq.s32.totalorder %s101, 0
    %s104 = sadd.s32 %s103, 1
    %s105 = scalar_select %p102, %s103, %s104
    %p108 = pneg %p102
    %p109 = scmp.eq.s32.totalorder %s9, 1
    %p110 = por %p108, %p109
    %p111 = scmp.ne.s32.totalorder %s103, %s106
    %p112 = scmp.eq.s32.totalorder %s9, 0
    %p113 = por %p111, %p112
    %p114 = scmp.ne.s32.totalorder %s103, %s106
    %p115 = scmp.eq.s32.totalorder %s14, 1
    %p116 = por %p114, %p115
    %p117 = scmp.ne.s32.totalorder %s106, %s107
    %p118 = scmp.eq.s32.totalorder %s14, 0
    %p119 = por %p117, %p118
    %p120 = scmp.ne.s32.totalorder %s106, %s107
    %p121 = scmp.eq.s32.totalorder %s15, 1
    %p122 = por %p120, %p121
    %p124 = scmp.ne.s32.totalorder %s107, %s123
    %p125 = scmp.eq.s32.totalorder %s15, 0
    %p126 = por %p124, %p125
    %p127 = scmp.le.s32.totalorder 1, %s9
    %p128 = scmp.lt.s32.totalorder %s9, 3
    %p129 = pnand %p127, %p128
    %p130 = pneg %p129
    // Predicated region
    $region9: #{single_detector_forward.1} parent=5 // pred_check
      _
    $region10: #{single_detector_forward.1} parent=5 // pred_check_branch
      %132 = sbr.rel (%p129) target = $region12
    $region11: #{single_detector_forward.1} parent=5 // pred_region
      %s133 = ssub.s32 %s9, 1
      // Predicated region
      $region13: #{single_detector_forward.1} parent=11 // pred_check
        %p134 = pneg %p42
      $region14: #{single_detector_forward.1} parent=11 // pred_check_branch
        %136 = sbr.rel (%p134) target = $region16
      $region15: #{single_detector_forward.1} parent=11 // pred_region
        _
      $region16: #{single_detector_forward.1} parent=11 // pred_fallthru
        _
      // Predicated region
      $region17: #{single_detector_forward.1} parent=11 // pred_check
        %p137 = pneg %p63
      $region18: #{single_detector_forward.1} parent=11 // pred_check_branch
        %139 = sbr.rel (%p137) target = $region20
      $region19: #{single_detector_forward.1} parent=11 // pred_region
        _
      $region20: #{single_detector_forward.1} parent=11 // pred_fallthru
        _
    $region12: #{single_detector_forward.1} parent=5 // pred_fallthru
      _
    %p140 = scmp.lt.s32.totalorder %s9, 2
    // Predicated region
    $region21: #{single_detector_forward.1} parent=5 // pred_check
      %p141 = pneg %p140
    $region22: #{single_detector_forward.1} parent=5 // pred_check_branch
      %143 = sbr.rel (%p141) target = $region24
    $region23: #{single_detector_forward.1} parent=5 // pred_region
      // Predicated region
      $region25: #{single_detector_forward.1} parent=23 // pred_check
        %p144 = pneg %p85
      $region26: #{single_detector_forward.1} parent=23 // pred_check_branch
        %146 = sbr.rel (%p144) target = $region28
      $region27: #{single_detector_forward.1} parent=23 // pred_region
        %p147 = scmp.lt.s32.totalorder %s16, 1
        %s148 = scalar_select %p147, %s16, 1
        %p149 = scmp.lt.s32.totalorder %s17, 0
        %s150 = scalar_select %p149, %s17, 0
        %s151 = smul.addr %s148, 4
        %s152 = sadd.s32 %s150, %s151
        %s153 = smul.addr %s152, 4
        %s154 = scalar_lea.vmem %s2, %s153
      $region28: #{single_detector_forward.1} parent=23 // pred_fallthru
        _
    $region24: #{single_detector_forward.1} parent=5 // pred_fallthru
      _
    %p155 = scmp.le.s32.totalorder 1, %s9
    %p156 = scmp.lt.s32.totalorder %s9, 3
    %p157 = pnand %p155, %p156
    %p158 = pneg %p157
    // Predicated region
    $region29: #{single_detector_forward.1} parent=5 // pred_check
      _
    $region30: #{single_detector_forward.1} parent=5 // pred_check_branch
      %160 = sbr.rel (%p157) target = $region32
    $region31: #{single_detector_forward.1} parent=5 // pred_region
      %s161 = ssub.s32 %s9, 1
      %p162 = pneg %p42
      %p163 = pneg %p39
      %p164 = pneg %p63
      %p165 = pneg %p60
      %p166 = scmp.lt.s32.totalorder %s18, 1
      %s167 = scalar_select %p166, %s18, 1
      %p168 = scmp.lt.s32.totalorder %s19, 0
      %s169 = scalar_select %p168, %s19, 0
      %s170 = smul.addr %s167, 4
      %s171 = sadd.s32 %s169, %s170
      %s172 = smul.addr %s171, 4
      %s173 = scalar_lea.vmem %s2, %s172
      %p174 = pneg %p91
      %p175 = pneg %p88
      %p176 = pneg %p119
      %p177 = pneg %p116
      %s178 = smul.u32 2, %s19
      %p179 = scmp.lt.s32.totalorder %s18, 1
      %s180 = scalar_select %p179, %s18, 1
      %p181 = scmp.lt.s32.totalorder %s178, 1
      %s182 = scalar_select %p181, %s178, 1
      %s183 = smul.addr %s180, 2
      %s184 = sadd.s32 %s182, %s183
      %s185 = smul.addr %s184, 8
      %s186 = scalar_lea.vmem %s3, %s185
      %p187 = scmp.lt.s32.totalorder %s18, 1
      %s188 = scalar_select %p187, %s18, 1
      %p189 = scmp.lt.s32.totalorder %s19, 0
      %s190 = scalar_select %p189, %s19, 0
      %s191 = smul.addr %s188, 4
      %s192 = sadd.s32 %s190, %s191
      %s193 = smul.addr %s192, 4
      %s194 = scalar_lea.vmem %s2, %s193
      %s195 = smul.u32 2, %s19
      %p196 = scmp.lt.s32.totalorder %s18, 1
      %s197 = scalar_select %p196, %s18, 1
      %p198 = scmp.lt.s32.totalorder %s195, 1
      %s199 = scalar_select %p198, %s195, 1
      %s200 = smul.addr %s197, 2
      %s201 = sadd.s32 %s199, %s200
      %s202 = smul.addr %s201, 8
      %s203 = scalar_lea.vmem %s3, %s202
      %s204 = smul.u32 2, %s19
      %v206 = vld [vmem:[%s0] sm:$0xf]
      %v207 = vld [vmem:[%s1] sm:$0xff]
      %v208 = vld [vmem:[%s194] sm:$0xf]
      %v209 = vld [vmem:[%s194 + $0x4] sm:$0xf]
      %v210 = vld [vmem:[%s194 + $0x8] sm:$0xf]
      %v211 = vld [vmem:[%s194 + $0xc] sm:$0xf]
      %213 = vset.pattern.permute.xlu0 0
      %214 = vperm.xlu0 %213, %v207
      %v215 = vpop.permute.xlu0 %214
      %v221 = vunpack.c.l.b16 %v208
      %v222 = vunpack.c.l.b16 %v209
      %v223 = vunpack.c.l.b16 %v210
      %v224 = vunpack.c.l.b16 %v211
      %v225 = vpack.c.b16 %v222, %v221
      %v226 = vpack.c.b16 %v224, %v223
      %vm229 = vcmask 261120
      %v231 = vsel %vm229, %v206, 0
      %233 = vmatpush.bf16.msra.mxu0 0
      %234 = vmatpush.bf16.msra.mxu0 0
      %235 = vmatpush.bf16.msra.mxu0 0
      %236 = vmatpush.bf16.msra.mxu0 0
      %237 = vmatpush.bf16.msra.mxu0 0
      %238 = vmatpush.bf16.msra.mxu0 0
      %239 = vmatpush.bf16.msra.mxu0 %v226
      %240 = vmatpush.bf16.msra.mxu0 %v225
      %241 = vmatmul.bf16.gmra.mxu0 %v231
      %v242 = vpop.f32.mrf.mxu0
      %v243 = vadd.f32 %v215, %v242
      %v244 = vpop.f32.mrf.mxu0
      %245 = vdwg.mxu0
      %v246 = vand.u32 2147483647, %v243
      %v247 = vsub.f32 0.0, %v246
      %v248 = vmul.f32 %v247, 1.442695
      %v249 = vpow.pop %v248
      %v250 = vadd.f32 %v249, 1.0
      %v251 = vrcp.pop %v250
      %v252 = vmul.f32 %v250, %v251
      %v253 = vsub.f32 1.0, %v252
      %v254 = vmul.f32 %v251, %v253
      %v255 = vadd.f32 %v251, %v254
      %vm256 = vweird.f32 %v250
      %vm257 = vweird.f32 %v251
      %vm258 = vmor %vm256, %vm257
      %v259 = vsel %vm258, %v251, %v255
      %v260 = vand.u32 2147483647, %v250
      %vm261 = vcmp.eq.f32.partialorder %v260, 8.507059e+37
      %v262 = vand.u32 %v250, 2147483648
      %v263 = vor.u32 1.1754944e-38, %v262
      %v264 = vsel %vm261, %v263, %v259
      %v265 = vmul.f32 %v249, %v264
      %vm266 = vcmp.ge.f32.partialorder %v243, 0.0
      %v267 = vsub.f32 1.0, %v265
      %v268 = vsel %vm266, %v267, %v265
      %269 = vxpose.xlu0.b32.start [1/16] %v268, 128
      %270 = vxpose.xlu0.b32.cont [2/16] 0.0, 128
      %271 = vxpose.xlu0.b32.cont [3/16] 0.0, 128
      %272 = vxpose.xlu0.b32.cont [4/16] 0.0, 128
      %273 = vxpose.xlu0.b32.cont [5/16] 0.0, 128
      %274 = vxpose.xlu0.b32.cont [6/16] 0.0, 128
      %275 = vxpose.xlu0.b32.cont [7/16] 0.0, 128
      %276 = vxpose.xlu0.b32.cont [8/16] 0.0, 128
      %277 = vxpose.xlu0.b32.cont [9/16] 0.0, 128
      %278 = vxpose.xlu0.b32.cont [10/16] 0.0, 128
      %279 = vxpose.xlu0.b32.cont [11/16] 0.0, 128
      %280 = vxpose.xlu0.b32.cont [12/16] 0.0, 128
      %281 = vxpose.xlu0.b32.cont [13/16] 0.0, 128
      %282 = vxpose.xlu0.b32.cont [14/16] 0.0, 128
      %283 = vxpose.xlu0.b32.cont [15/16] 0.0, 128
      %284 = vxpose.xlu0.b32.end [16/16] 0.0, 128
      %v285 = vpop.trf.xlu0
      %v286 = vpop.trf.xlu0
      %v287 = vpop.trf.xlu0
      %v288 = vpop.trf.xlu0
      %v289 = vpop.trf.xlu0
      %v290 = vpop.trf.xlu0
      %v291 = vpop.trf.xlu0
      %v292 = vpop.trf.xlu0
      %v293 = vpop.trf.xlu0
      %v294 = vpop.trf.xlu0
      %v295 = vpop.trf.xlu0
      %v296 = vpop.trf.xlu0
      %v297 = vpop.trf.xlu0
      %v298 = vpop.trf.xlu0
      %v299 = vpop.trf.xlu0
      %v300 = vpop.trf.xlu0
      %vm301 = vcmask 64512
      %302 = vst.msk [vmem:[%s203] sm:$0xff] %vm301, %v285
      %303 = vst.msk [vmem:[%s203 + $0x8] sm:$0xff] %vm301, %v286
      %s304 = smul.u32 2, %s19
      %p305 = scmp.lt.s32.totalorder %s18, 1
      %s306 = scalar_select %p305, %s18, 1
      %p307 = scmp.lt.s32.totalorder %s304, 1
      %s308 = scalar_select %p307, %s304, 1
      %s309 = smul.addr %s306, 2
      %s310 = sadd.s32 %s308, %s309
      %s311 = smul.addr %s310, 8
      %s312 = scalar_lea.vmem %s3, %s311
      // Predicated region
      $region33: #{single_detector_forward.1} parent=31 // pred_check
        %p313 = pneg %p116
      $region34: #{single_detector_forward.1} parent=31 // pred_check_branch
        %315 = sbr.rel (%p313) target = $region36
      $region35: #{single_detector_forward.1} parent=31 // pred_region
        %s316 = smul.u32 2, %s19
      $region36: #{single_detector_forward.1} parent=31 // pred_fallthru
        _
    $region32: #{single_detector_forward.1} parent=5 // pred_fallthru
      _
    %p317 = scmp.le.s32.totalorder 2, %s9
    // Predicated region
    $region37: #{single_detector_forward.1} parent=5 // pred_check
      %p318 = pneg %p317
    $region38: #{single_detector_forward.1} parent=5 // pred_check_branch
      %320 = sbr.rel (%p318) target = $region40
    $region39: #{single_detector_forward.1} parent=5 // pred_region
      %s321 = ssub.s32 %s9, 2
      // Predicated region
      $region41: #{single_detector_forward.1} parent=39 // pred_check
        %p322 = pneg %p122
      $region42: #{single_detector_forward.1} parent=39 // pred_check_branch
        %324 = sbr.rel (%p322) target = $region44
      $region43: #{single_detector_forward.1} parent=39 // pred_region
        %s325 = smul.u32 2, %s21
        %p326 = scmp.lt.s32.totalorder %s20, 1
        %s327 = scalar_select %p326, %s20, 1
        %p328 = scmp.lt.s32.totalorder %s325, 1
        %s329 = scalar_select %p328, %s325, 1
        %s330 = smul.addr %s327, 2
        %s331 = sadd.s32 %s329, %s330
        %s332 = smul.addr %s331, 8
        %s333 = scalar_lea.vmem %s3, %s332
      $region44: #{single_detector_forward.1} parent=39 // pred_fallthru
        _
    $region40: #{single_detector_forward.1} parent=5 // pred_fallthru
      _
  $region6: #{single_detector_forward.1} parent=0 // loop_footer
    %s13 = sadd.s32 1, %s9
  $region7: #{single_detector_forward.1} parent=0 // loop_footer_branch
    %8 = sbr.rel target = $region3
  $region8: #{single_detector_forward.1} parent=0 // loop_exit
    _

</llo_original>
